<compile_context>
chip_gen: v5e
topology: v5e:2x2
jax: 0.10.0
libtpu: 0.0.40
codegen_flags: <defaults>
</compile_context>

<pallas_src>
import functools

import jax
import jax.numpy as jnp
from jax.experimental import pallas as pl
from jax.experimental.pallas import tpu as pltpu


def _round_up(n, m):
    return ((n + m - 1) // m) * m


def _policy_kernel(x_ref, w1_ref, b1_ref, w2_ref, b2_ref, out_ref, *, num_actions):
    # x arrives in f32; cast to the MXU compute dtype right before the matmul.
    x = x_ref[...].astype(w1_ref.dtype)

    # fc1 + ReLU (f32 accumulation / epilogue).
    h = jnp.dot(x, w1_ref[...], preferred_element_type=jnp.float32)
    h = jnp.maximum(h + b1_ref[...], 0.0)

    # fc2 logits.
    logits = jnp.dot(h.astype(w2_ref.dtype), w2_ref[...],
                     preferred_element_type=jnp.float32) + b2_ref[...]

    # Numerically stable softmax over the padded action axis.  Padded action
    # lanes carry a -1e30 f32 bias -> exp underflows to exactly 0 there.
    m = jnp.max(logits, axis=-1, keepdims=True)
    e = jnp.exp(logits - m)
    denom = jnp.sum(e, axis=-1, keepdims=True)
    probs = e * pl.reciprocal(denom, approx=True)  # EUP slot

    # Only the real action columns are written back to HBM.
    out_ref[...] = probs[:, :num_actions].astype(out_ref.dtype)


def policy_discrete_forward(x, w1, b1, w2, b2, *, block_b=1024,
                            compute_dtype=jnp.bfloat16):
    """x: [B, S]; w1: [S, H]; b1: [1, H]; w2: [H, A]; b2: [1, A] -> [B, A] f32."""
    B, S = x.shape
    H = w1.shape[1]
    A = w2.shape[1]

    # Lane-dense padded feature dims; 16-row aligned batch tile.
    H_pad = _round_up(H, 128)
    A_pad = _round_up(A, 128)

    w_item = jnp.dtype(compute_dtype).itemsize
    weight_bytes = S * H_pad * w_item + H_pad * A_pad * w_item + (H_pad + A_pad) * 4

    def tile_bytes(tb):
        io = 2 * tb * S * 4 + 2 * tb * A * 4           # double-buffered x / out tiles
        live = tb * H_pad * 4 + 2 * tb * A_pad * 4     # h + logits/probs intermediates
        return io + live

    # Size the batch tile against a conservative VMEM budget (safe on v7x's
    # 64 MiB physical VMEM and v5e's small default scoped limit).
    budget = 40 * 1024 * 1024
    TB = max(16, min(_round_up(block_b, 16), _round_up(B, 16)))
    while TB > 16 and weight_bytes + tile_bytes(TB) > budget:
        TB = max(16, _round_up(TB // 2, 16))
    # TODO(synk): if weight_bytes alone exceeds the v7x budget, fall back to an
    # H-tiled reduction grid (f32 acc scratch + pl.when init/finalize) instead
    # of keeping both weight matrices fully resident.

    n_tiles = pl.cdiv(B, TB)
    B_pad = n_tiles * TB

    neg_big = -1e30  # finite "-inf" for padded action lanes (kept in f32)

    # x stays f32 (cast happens in-kernel); only pad batch rows when needed.
    x_p = x if B_pad == B else jnp.pad(x, ((0, B_pad - B), (0, 0)))
    w1_p = jnp.pad(w1.astype(compute_dtype), ((0, 0), (0, H_pad - H)))
    b1_p = jnp.pad(b1.astype(jnp.float32), ((0, 0), (0, H_pad - H)))
    w2_p = jnp.pad(w2.astype(compute_dtype), ((0, H_pad - H), (0, A_pad - A)))
    b2_p = jnp.pad(b2.astype(jnp.float32), ((0, 0), (0, A_pad - A)),
                   constant_values=neg_big)

    cost = pl.CostEstimate(
        flops=2 * B_pad * (S * H_pad + H_pad * A_pad),
        transcendentals=B_pad * A_pad,
        bytes_accessed=(B_pad * S * 4
                        + S * H_pad * w_item + H_pad * A_pad * w_item
                        + (H_pad + A_pad) * 4
                        + B_pad * A * 4),
    )

    vmem_limit = min(64 * 1024 * 1024,
                     max(32 * 1024 * 1024,
                         weight_bytes + tile_bytes(TB) + (8 << 20)))

    # v7x has 2 TensorCores per chip; CORE_PARALLEL splits batch tiles across
    # them.  Plain "parallel" elsewhere (near-zero codegen impact vs arbitrary).
    kind = ""
    try:
        kind = jax.devices()[0].device_kind.lower()
    except Exception:
        pass
    if n_tiles > 1 and ("v7" in kind or "tpu7" in kind.replace(" ", "")):
        dim_sem = (pltpu.CORE_PARALLEL,)
    else:
        dim_sem = ("parallel",)

    kernel = functools.partial(_policy_kernel, num_actions=A)
    out_shape = jax.ShapeDtypeStruct((B_pad, A), jnp.float32)

    def build_in_specs(weight_mode):
        kw = {} if weight_mode is None else {"pipeline_mode": weight_mode}
        return [
            pl.BlockSpec((TB, S), lambda i: (i, 0)),               # x batch tile
            pl.BlockSpec((S, H_pad), lambda i: (0, 0), **kw),      # W1 resident
            pl.BlockSpec((1, H_pad), lambda i: (0, 0), **kw),      # b1 resident
            pl.BlockSpec((H_pad, A_pad), lambda i: (0, 0), **kw),  # W2 resident
            pl.BlockSpec((1, A_pad), lambda i: (0, 0), **kw),      # b2 resident
        ]

    # Constant-index (resident) weights only need one VMEM buffer; Buffered(1)
    # halves their footprint.  Fall back to default buffering if rejected.
    weight_modes = []
    if hasattr(pl, "Buffered"):
        weight_modes.append(pl.Buffered(1))
    weight_modes.append(None)

    last_err = None
    for mode in weight_modes:
        try:
            out = pl.pallas_call(
                kernel,
                out_shape=out_shape,
                grid_spec=pltpu.PrefetchScalarGridSpec(
                    num_scalar_prefetch=0,
                    grid=(n_tiles,),
                    in_specs=build_in_specs(mode),
                    out_specs=pl.BlockSpec((TB, A), lambda i: (i, 0)),
                ),
                compiler_params=pltpu.CompilerParams(
                    dimension_semantics=dim_sem,
                    vmem_limit_bytes=vmem_limit,
                ),
                cost_estimate=cost,
            )(x_p, w1_p, b1_p, w2_p, b2_p)
            return out[:B]
        except Exception as e:  # robustness fallback for the Buffered(1) path
            last_err = e
            continue
    raise last_err


def init_params(key, state_dim, hidden_dim, action_dim):
    """Deterministic init mimicking torch.nn.Linear default (U(-1/sqrt(fan_in), +))."""
    k1, k2, k3, k4 = jax.random.split(key, 4)
    bound1 = 1.0 / jnp.sqrt(state_dim)
    bound2 = 1.0 / jnp.sqrt(hidden_dim)
    # Stored pre-transposed: [in, out]
    w1 = jax.random.uniform(k1, (state_dim, hidden_dim), jnp.float32, -bound1, bound1)
    b1 = jax.random.uniform(k2, (1, hidden_dim), jnp.float32, -bound1, bound1)
    w2 = jax.random.uniform(k3, (hidden_dim, action_dim), jnp.float32, -bound2, bound2)
    b2 = jax.random.uniform(k4, (1, action_dim), jnp.float32, -bound2, bound2)
    return w1, b1, w2, b2


if __name__ == "__main__":
    batch, state_dim, hidden_dim, action_dim = 2, 16, 32, 4

    key = jax.random.PRNGKey(0)
    kx, kp = jax.random.split(key)
    x = jax.random.normal(kx, (batch, state_dim), jnp.float32)
    w1, b1, w2, b2 = init_params(kp, state_dim, hidden_dim, action_dim)

    # Pure-JAX reference.
    h_ref = jnp.maximum(x @ w1 + b1, 0.0)
    ref = jax.nn.softmax(h_ref @ w2 + b2, axis=1)

    # f32 MXU path (tighter numerical check).
    out_f32 = jax.block_until_ready(
        policy_discrete_forward(x, w1, b1, w2, b2, compute_dtype=jnp.float32))
    assert out_f32.shape == (batch, action_dim)
    assert jnp.allclose(out_f32, ref, atol=5e-3), "f32 path mismatch"
    assert jnp.allclose(jnp.sum(out_f32, axis=1), 1.0, atol=1e-2)

    # bf16 MXU path (default fast path on v6e/v7x).
    out_bf16 = jax.block_until_ready(policy_discrete_forward(x, w1, b1, w2, b2))
    assert out_bf16.shape == (batch, action_dim)
    assert jnp.allclose(out_bf16, ref, atol=5e-2), "bf16 path mismatch"
    assert jnp.allclose(jnp.sum(out_bf16, axis=1), 1.0, atol=1e-2)

    print("KERNEL_OK")
</pallas_src>

<mosaic_0001>
module attributes {stable_mosaic.version = 11 : i64} {
  func.func @_policy_kernel(%arg0: i32, %arg1: memref<16x16xf32, #tpu.memory_space<vmem>>, %arg2: memref<16x128xf32, #tpu.memory_space<vmem>>, %arg3: memref<1x128xf32, #tpu.memory_space<vmem>>, %arg4: memref<128x128xf32, #tpu.memory_space<vmem>>, %arg5: memref<1x128xf32, #tpu.memory_space<vmem>>, %arg6: memref<16x4xf32, #tpu.memory_space<vmem>>) attributes {dimension_semantics = [#tpu.dimension_semantics<parallel>], iteration_bounds = array<i64: 1>, scalar_prefetch = 0 : i64, scratch_operands = 0 : i64, tpu.core_type = #tpu.core_type<tc>, window_params = [{transform_indices = @transform_0, window_bounds = array<i64: 16, 16>}, {pipeline_mode = #tpu.pipeline_mode<synchronous>, transform_indices = @transform_1, window_bounds = array<i64: 16, 128>}, {pipeline_mode = #tpu.pipeline_mode<synchronous>, transform_indices = @transform_2, window_bounds = array<i64: 1, 128>}, {pipeline_mode = #tpu.pipeline_mode<synchronous>, transform_indices = @transform_3, window_bounds = array<i64: 128, 128>}, {pipeline_mode = #tpu.pipeline_mode<synchronous>, transform_indices = @transform_4, window_bounds = array<i64: 1, 128>}, {transform_indices = @transform_5, window_bounds = array<i64: 16, 4>}]} {
    %c0 = arith.constant 0 : index
    %c0_0 = arith.constant 0 : index
    %0 = vector.load %arg1[%c0, %c0_0] : memref<16x16xf32, #tpu.memory_space<vmem>>, vector<16x16xf32>
    %c0_1 = arith.constant 0 : index
    %c0_2 = arith.constant 0 : index
    %1 = vector.load %arg2[%c0_1, %c0_2] : memref<16x128xf32, #tpu.memory_space<vmem>>, vector<16x128xf32>
    %cst = arith.constant dense<0.000000e+00> : vector<16x128xf32>
    %2 = tpu.matmul %0, %1, %cst {dimension_numbers = #tpu.dot_dimension_numbers<[1], [0], [0], [1], [0, 0, 1, 1], [], []>} : vector<16x16xf32>, vector<16x128xf32>, vector<16x128xf32> -> vector<16x128xf32>
    %c0_3 = arith.constant 0 : index
    %c0_4 = arith.constant 0 : index
    %3 = vector.load %arg3[%c0_3, %c0_4] : memref<1x128xf32, #tpu.memory_space<vmem>>, vector<1x128xf32>
    %4 = vector.broadcast %3 : vector<1x128xf32> to vector<16x128xf32>
    %5 = arith.addf %2, %4 : vector<16x128xf32>
    %cst_5 = arith.constant 0.000000e+00 : f32
    %6 = vector.broadcast %cst_5 : f32 to vector<16x128xf32>
    %7 = arith.maximumf %5, %6 : vector<16x128xf32>
    %c0_6 = arith.constant 0 : index
    %c0_7 = arith.constant 0 : index
    %8 = vector.load %arg4[%c0_6, %c0_7] : memref<128x128xf32, #tpu.memory_space<vmem>>, vector<128x128xf32>
    %cst_8 = arith.constant dense<0.000000e+00> : vector<16x128xf32>
    %9 = tpu.matmul %7, %8, %cst_8 {dimension_numbers = #tpu.dot_dimension_numbers<[1], [0], [0], [1], [0, 0, 1, 1], [], []>} : vector<16x128xf32>, vector<128x128xf32>, vector<16x128xf32> -> vector<16x128xf32>
    %c0_9 = arith.constant 0 : index
    %c0_10 = arith.constant 0 : index
    %10 = vector.load %arg5[%c0_9, %c0_10] : memref<1x128xf32, #tpu.memory_space<vmem>>, vector<1x128xf32>
    %11 = vector.broadcast %10 : vector<1x128xf32> to vector<16x128xf32>
    %12 = arith.addf %9, %11 : vector<16x128xf32>
    %cst_11 = arith.constant dense<0xFF800000> : vector<16xf32>
    %13 = vector.multi_reduction <maximumf>, %12, %cst_11 [1] : vector<16x128xf32> to vector<16xf32>
    %14 = vector.shape_cast %13 : vector<16xf32> to vector<16x1xf32>
    %15 = vector.broadcast %14 : vector<16x1xf32> to vector<16x128xf32>
    %16 = arith.subf %12, %15 : vector<16x128xf32>
    %17 = math.exp %16 : vector<16x128xf32>
    %cst_12 = arith.constant dense<0.000000e+00> : vector<16xf32>
    %18 = vector.multi_reduction <add>, %17, %cst_12 [1] : vector<16x128xf32> to vector<16xf32>
    %19 = vector.shape_cast %18 : vector<16xf32> to vector<16x1xf32>
    %20 = tpu.reciprocal %19 {approx = true} : vector<16x1xf32> -> vector<16x1xf32>
    %21 = vector.broadcast %20 : vector<16x1xf32> to vector<16x128xf32>
    %22 = arith.mulf %17, %21 : vector<16x128xf32>
    %23 = vector.extract_strided_slice %22 {offsets = [0, 0], sizes = [16, 4], strides = [1, 1]} : vector<16x128xf32> to vector<16x4xf32>
    %c0_13 = arith.constant 0 : index
    %c0_14 = arith.constant 0 : index
    %24 = vector.load %arg6[%c0_13, %c0_14] : memref<16x4xf32, #tpu.memory_space<vmem>>, vector<16x4xf32>
    tpu.vector_store %arg6[%c0_13, %c0_14], %23 {strides = array<i32>} : memref<16x4xf32, #tpu.memory_space<vmem>>, vector<16x4xf32>,
    return
  }
  func.func @transform_0(%arg0: i32) -> (i32, i32) {
    %c0_i32 = arith.constant 0 : i32
    %c0_i32_0 = arith.constant 0 : i32
    return %arg0, %c0_i32 : i32, i32
  }
  func.func @transform_1(%arg0: i32) -> (i32, i32) {
    %c0_i32 = arith.constant 0 : i32
    %c0_i32_0 = arith.constant 0 : i32
    %c0_i32_1 = arith.constant 0 : i32
    return %c0_i32, %c0_i32_0 : i32, i32
  }
  func.func @transform_2(%arg0: i32) -> (i32, i32) {
    %c0_i32 = arith.constant 0 : i32
    %c0_i32_0 = arith.constant 0 : i32
    %c0_i32_1 = arith.constant 0 : i32
    return %c0_i32, %c0_i32_0 : i32, i32
  }
  func.func @transform_3(%arg0: i32) -> (i32, i32) {
    %c0_i32 = arith.constant 0 : i32
    %c0_i32_0 = arith.constant 0 : i32
    %c0_i32_1 = arith.constant 0 : i32
    return %c0_i32, %c0_i32_0 : i32, i32
  }
  func.func @transform_4(%arg0: i32) -> (i32, i32) {
    %c0_i32 = arith.constant 0 : i32
    %c0_i32_0 = arith.constant 0 : i32
    %c0_i32_1 = arith.constant 0 : i32
    return %c0_i32, %c0_i32_0 : i32, i32
  }
  func.func @transform_5(%arg0: i32) -> (i32, i32) {
    %c0_i32 = arith.constant 0 : i32
    %c0_i32_0 = arith.constant 0 : i32
    return %arg0, %c0_i32 : i32, i32
  }
}

module attributes {stable_mosaic.version = 11 : i64} {
  func.func @_policy_kernel(%arg0: i32, %arg1: memref<16x16xf32, #tpu.memory_space<vmem>>, %arg2: memref<16x128xf32, #tpu.memory_space<vmem>>, %arg3: memref<1x128xf32, #tpu.memory_space<vmem>>, %arg4: memref<128x128xf32, #tpu.memory_space<vmem>>, %arg5: memref<1x128xf32, #tpu.memory_space<vmem>>, %arg6: memref<16x4xf32, #tpu.memory_space<vmem>>) attributes {dimension_semantics = [#tpu.dimension_semantics<parallel>], iteration_bounds = array<i64: 1>, scalar_prefetch = 0 : i64, scratch_operands = 0 : i64, tpu.core_type = #tpu.core_type<tc>, window_params = [{transform_indices = @transform_0, window_bounds = array<i64: 16, 16>}, {pipeline_mode = #tpu.pipeline_mode<synchronous>, transform_indices = @transform_1, window_bounds = array<i64: 16, 128>}, {pipeline_mode = #tpu.pipeline_mode<synchronous>, transform_indices = @transform_2, window_bounds = array<i64: 1, 128>}, {pipeline_mode = #tpu.pipeline_mode<synchronous>, transform_indices = @transform_3, window_bounds = array<i64: 128, 128>}, {pipeline_mode = #tpu.pipeline_mode<synchronous>, transform_indices = @transform_4, window_bounds = array<i64: 1, 128>}, {transform_indices = @transform_5, window_bounds = array<i64: 16, 4>}]} {
    %c0 = arith.constant 0 : index
    %c0_0 = arith.constant 0 : index
    %0 = vector.load %arg1[%c0, %c0_0] : memref<16x16xf32, #tpu.memory_space<vmem>>, vector<16x16xf32>
    %c0_1 = arith.constant 0 : index
    %c0_2 = arith.constant 0 : index
    %1 = vector.load %arg2[%c0_1, %c0_2] : memref<16x128xf32, #tpu.memory_space<vmem>>, vector<16x128xf32>
    %cst = arith.constant dense<0.000000e+00> : vector<16x128xf32>
    %2 = tpu.matmul %0, %1, %cst {dimension_numbers = #tpu.dot_dimension_numbers<[1], [0], [0], [1], [0, 0, 1, 1], [], []>} : vector<16x16xf32>, vector<16x128xf32>, vector<16x128xf32> -> vector<16x128xf32>
    %c0_3 = arith.constant 0 : index
    %c0_4 = arith.constant 0 : index
    %3 = vector.load %arg3[%c0_3, %c0_4] : memref<1x128xf32, #tpu.memory_space<vmem>>, vector<1x128xf32>
    %4 = vector.broadcast %3 : vector<1x128xf32> to vector<16x128xf32>
    %5 = arith.addf %2, %4 : vector<16x128xf32>
    %cst_5 = arith.constant 0.000000e+00 : f32
    %6 = vector.broadcast %cst_5 : f32 to vector<16x128xf32>
    %7 = arith.maximumf %5, %6 : vector<16x128xf32>
    %c0_6 = arith.constant 0 : index
    %c0_7 = arith.constant 0 : index
    %8 = vector.load %arg4[%c0_6, %c0_7] : memref<128x128xf32, #tpu.memory_space<vmem>>, vector<128x128xf32>
    %cst_8 = arith.constant dense<0.000000e+00> : vector<16x128xf32>
    %9 = tpu.matmul %7, %8, %cst_8 {dimension_numbers = #tpu.dot_dimension_numbers<[1], [0], [0], [1], [0, 0, 1, 1], [], []>} : vector<16x128xf32>, vector<128x128xf32>, vector<16x128xf32> -> vector<16x128xf32>
    %c0_9 = arith.constant 0 : index
    %c0_10 = arith.constant 0 : index
    %10 = vector.load %arg5[%c0_9, %c0_10] : memref<1x128xf32, #tpu.memory_space<vmem>>, vector<1x128xf32>
    %11 = vector.broadcast %10 : vector<1x128xf32> to vector<16x128xf32>
    %12 = arith.addf %9, %11 : vector<16x128xf32>
    %cst_11 = arith.constant dense<0xFF800000> : vector<16xf32>
    %13 = vector.multi_reduction <maximumf>, %12, %cst_11 [1] : vector<16x128xf32> to vector<16xf32>
    %14 = vector.shape_cast %13 : vector<16xf32> to vector<16x1xf32>
    %15 = vector.broadcast %14 : vector<16x1xf32> to vector<16x128xf32>
    %16 = arith.subf %12, %15 : vector<16x128xf32>
    %17 = math.exp %16 : vector<16x128xf32>
    %cst_12 = arith.constant dense<0.000000e+00> : vector<16xf32>
    %18 = vector.multi_reduction <add>, %17, %cst_12 [1] : vector<16x128xf32> to vector<16xf32>
    %19 = vector.shape_cast %18 : vector<16xf32> to vector<16x1xf32>
    %20 = tpu.reciprocal %19 {approx = true} : vector<16x1xf32> -> vector<16x1xf32>
    %21 = vector.broadcast %20 : vector<16x1xf32> to vector<16x128xf32>
    %22 = arith.mulf %17, %21 : vector<16x128xf32>
    %23 = vector.extract_strided_slice %22 {offsets = [0, 0], sizes = [16, 4], strides = [1, 1]} : vector<16x128xf32> to vector<16x4xf32>
    %c0_13 = arith.constant 0 : index
    %c0_14 = arith.constant 0 : index
    %24 = vector.load %arg6[%c0_13, %c0_14] : memref<16x4xf32, #tpu.memory_space<vmem>>, vector<16x4xf32>
    tpu.vector_store %arg6[%c0_13, %c0_14], %23 {strides = array<i32>} : memref<16x4xf32, #tpu.memory_space<vmem>>, vector<16x4xf32>,
    return
  }
  func.func @transform_0(%arg0: i32) -> (i32, i32) {
    %c0_i32 = arith.constant 0 : i32
    %c0_i32_0 = arith.constant 0 : i32
    return %arg0, %c0_i32 : i32, i32
  }
  func.func @transform_1(%arg0: i32) -> (i32, i32) {
    %c0_i32 = arith.constant 0 : i32
    %c0_i32_0 = arith.constant 0 : i32
    %c0_i32_1 = arith.constant 0 : i32
    return %c0_i32, %c0_i32_0 : i32, i32
  }
  func.func @transform_2(%arg0: i32) -> (i32, i32) {
    %c0_i32 = arith.constant 0 : i32
    %c0_i32_0 = arith.constant 0 : i32
    %c0_i32_1 = arith.constant 0 : i32
    return %c0_i32, %c0_i32_0 : i32, i32
  }
  func.func @transform_3(%arg0: i32) -> (i32, i32) {
    %c0_i32 = arith.constant 0 : i32
    %c0_i32_0 = arith.constant 0 : i32
    %c0_i32_1 = arith.constant 0 : i32
    return %c0_i32, %c0_i32_0 : i32, i32
  }
  func.func @transform_4(%arg0: i32) -> (i32, i32) {
    %c0_i32 = arith.constant 0 : i32
    %c0_i32_0 = arith.constant 0 : i32
    %c0_i32_1 = arith.constant 0 : i32
    return %c0_i32, %c0_i32_0 : i32, i32
  }
  func.func @transform_5(%arg0: i32) -> (i32, i32) {
    %c0_i32 = arith.constant 0 : i32
    %c0_i32_0 = arith.constant 0 : i32
    return %arg0, %c0_i32 : i32, i32
  }
}

</mosaic_0001>

<llo_original>
// kernel: tpu_custom_call.1
$region0: #{tpu_custom_call.1}
  #allocation0 [shape = 'u32[]', space=smem, size = 0x4, offset = 0x4, fixed_abs, tag = 'smem constant byte address 0x4 - core index']
  #allocation1 [shape = 'u32[72,128]{1,0:T(1,128)}', space=vmem, size = 0x9000, scoped, tag = 'internal scratch']
  %s0 = inlined_call_operand.hbm [shape: f32[16,16], index: 0, kind: input, shape index: {}]
  %s1 = inlined_call_operand.hbm [shape: f32[16,128], index: 1, kind: input, shape index: {}]
  %s2 = inlined_call_operand.vmem [shape: f32[1,128], index: 2, kind: input, shape index: {}]
  %s3 = inlined_call_operand.hbm [shape: f32[128,128], index: 3, kind: input, shape index: {}]
  %s4 = inlined_call_operand.vmem [shape: f32[1,128], index: 4, kind: input, shape index: {}]
  %s5 = inlined_call_operand.vmem [shape: f32[16,4], index: 5, kind: output, shape index: {}]
  %s6 = sld [smem:[#allocation0]]
  $region42: #{tpu_custom_call.1} parent=0
    _
  %s8 = ssub.s32 1, %s6
  %s9 = scalar_select 0, %s8, %s6
  $region1: #{tpu_custom_call.1} parent=0
    #allocation2 [shape = 'u8[8192]{0}', space=vmem, size = 0x2000, scoped, tag = 'input window, operand 0, single buffered']
    #allocation3 [shape = 's32[1]{0}', space=sflag, size = 0x4, scoped, tag = 'scoped memory for tpu_custom_call.1']
    #allocation4 [shape = 'u8[8192]{0}', space=vmem, size = 0x2000, scoped, tag = 'input window, operand 1, single buffered']
    #allocation5 [shape = 's32[1]{0}', space=sflag, size = 0x4, scoped, tag = 'scoped memory for tpu_custom_call.1']
    #allocation6 [shape = 'u8[65536]{0}', space=vmem, size = 0x10000, scoped, tag = 'input window, operand 3, single buffered']
    %10 = vsyncpa [#allocation3], 0
    %11 = vsyncpa [#allocation5], 0
    // Predicated region
    $region2: #{tpu_custom_call.1} parent=1 // pred_check
      _
    $region3: #{tpu_custom_call.1} parent=1 // pred_check_branch
      %13 = sbr.rel (0) target = $region5
    $region4: #{tpu_custom_call.1} parent=1 // pred_region
      %15 = vsyncadd [#allocation3], 0
      %s16 = sshll.u32 %s0, 4
      %s17 = int_to_ptr.hbm [resolvable:$true] %s16
      %s18 = sshll.u32 [#allocation2], 4
      %s19 = int_to_ptr.vmem [resolvable:$true] %s18
      %24 = dma.hbm_to_vmem [thread:$0]  %s17, 256, %s19, [#allocation3], 128, 128, 8
    $region5: #{tpu_custom_call.1} parent=1 // pred_fallthru
      _
    // Predicated region
    $region6: #{tpu_custom_call.1} parent=1 // pred_check
      _
    $region7: #{tpu_custom_call.1} parent=1 // pred_check_branch
      %26 = sbr.rel (0) target = $region9
    $region8: #{tpu_custom_call.1} parent=1 // pred_region
      %28 = vsyncadd [#allocation5], 0
      %s29 = sshll.u32 %s1, 4
      %s30 = int_to_ptr.hbm [resolvable:$true] %s29
      %s31 = sshll.u32 [#allocation4], 4
      %s32 = int_to_ptr.vmem [resolvable:$true] %s31
      %37 = dma.hbm_to_vmem [thread:$0]  %s30, 256, %s32, [#allocation5], 128, 128, 8
    $region9: #{tpu_custom_call.1} parent=1 // pred_fallthru
      _
    // Predicated region
    $region10: #{tpu_custom_call.1} parent=1 // pred_check
      _
    $region11: #{tpu_custom_call.1} parent=1 // pred_check_branch
      %39 = sbr.rel (0) target = $region13
    $region12: #{tpu_custom_call.1} parent=1 // pred_region
      _
    $region13: #{tpu_custom_call.1} parent=1 // pred_fallthru
      _
    // Predicated region
    $region14: #{tpu_custom_call.1} parent=1 // pred_check
      _
    $region15: #{tpu_custom_call.1} parent=1 // pred_check_branch
      %41 = sbr.rel (0) target = $region17
    $region16: #{tpu_custom_call.1} parent=1 // pred_region
      %43 = vsyncadd [#allocation5], 0
      %s44 = sshll.u32 %s3, 4
      %s45 = int_to_ptr.hbm [resolvable:$true] %s44
      %s46 = sshll.u32 [#allocation6], 4
      %s47 = int_to_ptr.vmem [resolvable:$true] %s46
      %52 = dma.hbm_to_vmem [thread:$0]  %s45, 2048, %s47, [#allocation5], 128, 128, 8
    $region17: #{tpu_custom_call.1} parent=1 // pred_fallthru
      _
    // Predicated region
    $region18: #{tpu_custom_call.1} parent=1 // pred_check
      _
    $region19: #{tpu_custom_call.1} parent=1 // pred_check_branch
      %54 = sbr.rel (0) target = $region21
    $region20: #{tpu_custom_call.1} parent=1 // pred_region
      _
    $region21: #{tpu_custom_call.1} parent=1 // pred_fallthru
      _
    // Predicated region
    $region22: #{tpu_custom_call.1} parent=1 // pred_check
      _
    $region23: #{tpu_custom_call.1} parent=1 // pred_check_branch
      %56 = sbr.rel (0) target = $region25
    $region24: #{tpu_custom_call.1} parent=1 // pred_region
      %58 = dma.done [#allocation3], 256
    $region25: #{tpu_custom_call.1} parent=1 // pred_fallthru
      _
    // Predicated region
    $region26: #{tpu_custom_call.1} parent=1 // pred_check
      _
    $region27: #{tpu_custom_call.1} parent=1 // pred_check_branch
      %60 = sbr.rel (0) target = $region29
    $region28: #{tpu_custom_call.1} parent=1 // pred_region
      %62 = dma.done [#allocation5], 256
    $region29: #{tpu_custom_call.1} parent=1 // pred_fallthru
      _
    // Predicated region
    $region30: #{tpu_custom_call.1} parent=1 // pred_check
      _
    $region31: #{tpu_custom_call.1} parent=1 // pred_check_branch
      %64 = sbr.rel (0) target = $region33
    $region32: #{tpu_custom_call.1} parent=1 // pred_region
      %66 = dma.done [#allocation5], 2048
    $region33: #{tpu_custom_call.1} parent=1 // pred_fallthru
      _
    %v67 = vld [vmem:[#allocation2] sm:$0xff]
    %v68 = vld [vmem:[#allocation2 + $0x8] sm:$0xff]
    %v69 = vld [vmem:[#allocation4] sm:$0xff]
    %v70 = vld [vmem:[#allocation4 + $0x8] sm:$0xff]
    %v71 = vld [vmem:[%s2] sm:$0x1]
    %v73 = vperm.slane %v71, 0
    %vm75 = vcmask 130048
    %v77 = vsel %vm75, %v67, 0
    %v80 = vsel %vm75, %v68, 0
    %82 = vmatpush.msra.mxu0 0.0
    %83 = vmatpush.msra.mxu0 0.0
    %84 = vmatpush.msra.mxu0 0.0
    %85 = vmatpush.msra.mxu0 0.0
    %86 = vmatpush.msra.mxu0 0.0
    %87 = vmatpush.msra.mxu0 0.0
    %88 = vmatpush.msra.mxu0 0.0
    %89 = vmatpush.msra.mxu0 0.0
    %90 = vmatpush.msra.mxu0 0.0
    %91 = vmatpush.msra.mxu0 0.0
    %92 = vmatpush.msra.mxu0 0.0
    %93 = vmatpush.msra.mxu0 0.0
    %94 = vmatpush.msra.mxu0 0.0
    %95 = vmatpush.msra.mxu0 0.0
    %96 = vmatpush.msra.mxu0 %v70
    %97 = vmatpush.msra.mxu0 %v69
    %98 = vmatmul.f32.gmra.mxu0 %v77
    %v99 = vpop.f32.mrf.mxu0
    %v100 = vadd.f32 %v73, %v99
    %101 = vmatmul.f32.gmra.mxu0 %v80
    %v102 = vpop.f32.mrf.mxu0
    %v103 = vadd.f32 %v73, %v102
    %104 = vdwg.mxu0
    %v105 = vmax.f32 %v100, 0.0
    %v106 = vmax.f32 %v103, 0.0
    %v107 = vld [vmem:[#allocation6] sm:$0xff]
    %v108 = vld [vmem:[#allocation6 + $0x8] sm:$0xff]
    %v109 = vld [vmem:[#allocation6 + $0x10] sm:$0xff]
    %v110 = vld [vmem:[#allocation6 + $0x18] sm:$0xff]
    %v111 = vld [vmem:[#allocation6 + $0x20] sm:$0xff]
    %v112 = vld [vmem:[#allocation6 + $0x28] sm:$0xff]
    %v113 = vld [vmem:[#allocation6 + $0x30] sm:$0xff]
    %v114 = vld [vmem:[#allocation6 + $0x38] sm:$0xff]
    %v115 = vld [vmem:[#allocation6 + $0x40] sm:$0xff]
    %v116 = vld [vmem:[#allocation6 + $0x48] sm:$0xff]
    %v117 = vld [vmem:[#allocation6 + $0x50] sm:$0xff]
    %v118 = vld [vmem:[#allocation6 + $0x58] sm:$0xff]
    %v119 = vld [vmem:[#allocation6 + $0x60] sm:$0xff]
    %v120 = vld [vmem:[#allocation6 + $0x68] sm:$0xff]
    %v121 = vld [vmem:[#allocation6 + $0x70] sm:$0xff]
    %v122 = vld [vmem:[#allocation6 + $0x78] sm:$0xff]
    %v123 = vld [vmem:[%s4] sm:$0x1]
    %v125 = vperm.slane %v123, 0
    %127 = vmatpush.msra.mxu0 %v122
    %128 = vmatpush.msra.mxu0 %v121
    %129 = vmatpush.msra.mxu0 %v120
    %130 = vmatpush.msra.mxu0 %v119
    %131 = vmatpush.msra.mxu0 %v118
    %132 = vmatpush.msra.mxu0 %v117
    %133 = vmatpush.msra.mxu0 %v116
    %134 = vmatpush.msra.mxu0 %v115
    %135 = vmatpush.msra.mxu0 %v114
    %136 = vmatpush.msra.mxu0 %v113
    %137 = vmatpush.msra.mxu0 %v112
    %138 = vmatpush.msra.mxu0 %v111
    %139 = vmatpush.msra.mxu0 %v110
    %140 = vmatpush.msra.mxu0 %v109
    %141 = vmatpush.msra.mxu0 %v108
    %142 = vmatpush.msra.mxu0 %v107
    %143 = vmatmul.f32.gmra.mxu0 %v105
    %v144 = vpop.f32.mrf.mxu0
    %v145 = vadd.f32 %v125, %v144
    %146 = vmatmul.f32.gmra.mxu0 %v106
    %v147 = vpop.f32.mrf.mxu0
    %v148 = vadd.f32 %v125, %v147
    %149 = vdwg.mxu0
    %150 = vmax.xlane.f32.xlu0 %v145
    %v151 = vpop.xlane.xlu0 %150
    %152 = vmax.xlane.f32.xlu0 %v148
    %v153 = vpop.xlane.xlu0 %152
    %v154 = vsub.f32 %v145, %v151
    %v155 = vsub.f32 %v148, %v153
    %v156 = vmul.f32 %v154, 1.442695
    %v157 = vpow.pop %v156
    %v158 = vmul.f32 %v155, 1.442695
    %v159 = vpow.pop %v158
    %160 = vadd.xlane.f32.xlu0 %v157
    %v161 = vpop.xlane.xlu0 %160
    %162 = vadd.xlane.f32.xlu0 %v159
    %v163 = vpop.xlane.xlu0 %162
    %v164 = vrcp.pop %v161
    %v165 = vrcp.pop %v163
    %v166 = vmul.f32 %v157, %v164
    %v167 = vmul.f32 %v159, %v165
    %vm168 = vcmask 31744
    %169 = vst.msk [vmem:[%s5] sm:$0xff] %vm168, %v166
    %170 = vst.msk [vmem:[%s5 + $0x8] sm:$0xff] %vm168, %v167
    // Predicated region
    $region34: #{tpu_custom_call.1} parent=1 // pred_check
      _
    $region35: #{tpu_custom_call.1} parent=1 // pred_check_branch
      %172 = sbr.rel (0) target = $region37
    $region36: #{tpu_custom_call.1} parent=1 // pred_region
      _
    $region37: #{tpu_custom_call.1} parent=1 // pred_fallthru
      _
    // Predicated region
    $region38: #{tpu_custom_call.1} parent=1 // pred_check
      _
    $region39: #{tpu_custom_call.1} parent=1 // pred_check_branch
      %174 = sbr.rel (0) target = $region41
    $region40: #{tpu_custom_call.1} parent=1 // pred_region
      _
    $region41: #{tpu_custom_call.1} parent=1 // pred_fallthru
      _
    %175 = vsyncpa [#allocation3], 1
    %176 = vsyncpa [#allocation5], 1

// kernel: tpu_custom_call.1
$region0: #{tpu_custom_call.1}
  #allocation0 [shape = 'u32[]', space=smem, size = 0x4, offset = 0x4, fixed_abs, tag = 'smem constant byte address 0x4 - core index']
  #allocation1 [shape = 'u32[72,128]{1,0:T(1,128)}', space=vmem, size = 0x9000, scoped, tag = 'internal scratch']
  %s0 = inlined_call_operand.hbm [shape: f32[16,16], index: 0, kind: input, shape index: {}]
  %s1 = inlined_call_operand.hbm [shape: f32[16,128], index: 1, kind: input, shape index: {}]
  %s2 = inlined_call_operand.vmem [shape: f32[1,128], index: 2, kind: input, shape index: {}]
  %s3 = inlined_call_operand.hbm [shape: f32[128,128], index: 3, kind: input, shape index: {}]
  %s4 = inlined_call_operand.vmem [shape: f32[1,128], index: 4, kind: input, shape index: {}]
  %s5 = inlined_call_operand.vmem [shape: f32[16,4], index: 5, kind: output, shape index: {}]
  %s6 = sld [smem:[#allocation0]]
  $region42: #{tpu_custom_call.1} parent=0
    _
  %s8 = ssub.s32 1, %s6
  %s9 = scalar_select 0, %s8, %s6
  $region1: #{tpu_custom_call.1} parent=0
    #allocation2 [shape = 'u8[8192]{0}', space=vmem, size = 0x2000, scoped, tag = 'input window, operand 0, single buffered']
    #allocation3 [shape = 's32[1]{0}', space=sflag, size = 0x4, scoped, tag = 'scoped memory for tpu_custom_call.1']
    #allocation4 [shape = 'u8[8192]{0}', space=vmem, size = 0x2000, scoped, tag = 'input window, operand 1, single buffered']
    #allocation5 [shape = 's32[1]{0}', space=sflag, size = 0x4, scoped, tag = 'scoped memory for tpu_custom_call.1']
    #allocation6 [shape = 'u8[65536]{0}', space=vmem, size = 0x10000, scoped, tag = 'input window, operand 3, single buffered']
    %10 = vsyncpa [#allocation3], 0
    %11 = vsyncpa [#allocation5], 0
    // Predicated region
    $region2: #{tpu_custom_call.1} parent=1 // pred_check
      _
    $region3: #{tpu_custom_call.1} parent=1 // pred_check_branch
      %13 = sbr.rel (0) target = $region5
    $region4: #{tpu_custom_call.1} parent=1 // pred_region
      %15 = vsyncadd [#allocation3], 0
      %s16 = sshll.u32 %s0, 4
      %s17 = int_to_ptr.hbm [resolvable:$true] %s16
      %s18 = sshll.u32 [#allocation2], 4
      %s19 = int_to_ptr.vmem [resolvable:$true] %s18
      %24 = dma.hbm_to_vmem [thread:$0]  %s17, 256, %s19, [#allocation3], 128, 128, 8
    $region5: #{tpu_custom_call.1} parent=1 // pred_fallthru
      _
    // Predicated region
    $region6: #{tpu_custom_call.1} parent=1 // pred_check
      _
    $region7: #{tpu_custom_call.1} parent=1 // pred_check_branch
      %26 = sbr.rel (0) target = $region9
    $region8: #{tpu_custom_call.1} parent=1 // pred_region
      %28 = vsyncadd [#allocation5], 0
      %s29 = sshll.u32 %s1, 4
      %s30 = int_to_ptr.hbm [resolvable:$true] %s29
      %s31 = sshll.u32 [#allocation4], 4
      %s32 = int_to_ptr.vmem [resolvable:$true] %s31
      %37 = dma.hbm_to_vmem [thread:$0]  %s30, 256, %s32, [#allocation5], 128, 128, 8
    $region9: #{tpu_custom_call.1} parent=1 // pred_fallthru
      _
    // Predicated region
    $region10: #{tpu_custom_call.1} parent=1 // pred_check
      _
    $region11: #{tpu_custom_call.1} parent=1 // pred_check_branch
      %39 = sbr.rel (0) target = $region13
    $region12: #{tpu_custom_call.1} parent=1 // pred_region
      _
    $region13: #{tpu_custom_call.1} parent=1 // pred_fallthru
      _
    // Predicated region
    $region14: #{tpu_custom_call.1} parent=1 // pred_check
      _
    $region15: #{tpu_custom_call.1} parent=1 // pred_check_branch
      %41 = sbr.rel (0) target = $region17
    $region16: #{tpu_custom_call.1} parent=1 // pred_region
      %43 = vsyncadd [#allocation5], 0
      %s44 = sshll.u32 %s3, 4
      %s45 = int_to_ptr.hbm [resolvable:$true] %s44
      %s46 = sshll.u32 [#allocation6], 4
      %s47 = int_to_ptr.vmem [resolvable:$true] %s46
      %52 = dma.hbm_to_vmem [thread:$0]  %s45, 2048, %s47, [#allocation5], 128, 128, 8
    $region17: #{tpu_custom_call.1} parent=1 // pred_fallthru
      _
    // Predicated region
    $region18: #{tpu_custom_call.1} parent=1 // pred_check
      _
    $region19: #{tpu_custom_call.1} parent=1 // pred_check_branch
      %54 = sbr.rel (0) target = $region21
    $region20: #{tpu_custom_call.1} parent=1 // pred_region
      _
    $region21: #{tpu_custom_call.1} parent=1 // pred_fallthru
      _
    // Predicated region
    $region22: #{tpu_custom_call.1} parent=1 // pred_check
      _
    $region23: #{tpu_custom_call.1} parent=1 // pred_check_branch
      %56 = sbr.rel (0) target = $region25
    $region24: #{tpu_custom_call.1} parent=1 // pred_region
      %58 = dma.done [#allocation3], 256
    $region25: #{tpu_custom_call.1} parent=1 // pred_fallthru
      _
    // Predicated region
    $region26: #{tpu_custom_call.1} parent=1 // pred_check
      _
    $region27: #{tpu_custom_call.1} parent=1 // pred_check_branch
      %60 = sbr.rel (0) target = $region29
    $region28: #{tpu_custom_call.1} parent=1 // pred_region
      %62 = dma.done [#allocation5], 256
    $region29: #{tpu_custom_call.1} parent=1 // pred_fallthru
      _
    // Predicated region
    $region30: #{tpu_custom_call.1} parent=1 // pred_check
      _
    $region31: #{tpu_custom_call.1} parent=1 // pred_check_branch
      %64 = sbr.rel (0) target = $region33
    $region32: #{tpu_custom_call.1} parent=1 // pred_region
      %66 = dma.done [#allocation5], 2048
    $region33: #{tpu_custom_call.1} parent=1 // pred_fallthru
      _
    %v67 = vld [vmem:[#allocation2] sm:$0xff]
    %v68 = vld [vmem:[#allocation2 + $0x8] sm:$0xff]
    %v69 = vld [vmem:[#allocation4] sm:$0xff]
    %v70 = vld [vmem:[#allocation4 + $0x8] sm:$0xff]
    %v71 = vld [vmem:[%s2] sm:$0x1]
    %v73 = vperm.slane %v71, 0
    %vm75 = vcmask 130048
    %v77 = vsel %vm75, %v67, 0
    %v80 = vsel %vm75, %v68, 0
    %82 = vmatpush.msra.mxu0 0.0
    %83 = vmatpush.msra.mxu0 0.0
    %84 = vmatpush.msra.mxu0 0.0
    %85 = vmatpush.msra.mxu0 0.0
    %86 = vmatpush.msra.mxu0 0.0
    %87 = vmatpush.msra.mxu0 0.0
    %88 = vmatpush.msra.mxu0 0.0
    %89 = vmatpush.msra.mxu0 0.0
    %90 = vmatpush.msra.mxu0 0.0
    %91 = vmatpush.msra.mxu0 0.0
    %92 = vmatpush.msra.mxu0 0.0
    %93 = vmatpush.msra.mxu0 0.0
    %94 = vmatpush.msra.mxu0 0.0
    %95 = vmatpush.msra.mxu0 0.0
    %96 = vmatpush.msra.mxu0 %v70
    %97 = vmatpush.msra.mxu0 %v69
    %98 = vmatmul.f32.gmra.mxu0 %v77
    %v99 = vpop.f32.mrf.mxu0
    %v100 = vadd.f32 %v73, %v99
    %101 = vmatmul.f32.gmra.mxu0 %v80
    %v102 = vpop.f32.mrf.mxu0
    %v103 = vadd.f32 %v73, %v102
    %104 = vdwg.mxu0
    %v105 = vmax.f32 %v100, 0.0
    %v106 = vmax.f32 %v103, 0.0
    %v107 = vld [vmem:[#allocation6] sm:$0xff]
    %v108 = vld [vmem:[#allocation6 + $0x8] sm:$0xff]
    %v109 = vld [vmem:[#allocation6 + $0x10] sm:$0xff]
    %v110 = vld [vmem:[#allocation6 + $0x18] sm:$0xff]
    %v111 = vld [vmem:[#allocation6 + $0x20] sm:$0xff]
    %v112 = vld [vmem:[#allocation6 + $0x28] sm:$0xff]
    %v113 = vld [vmem:[#allocation6 + $0x30] sm:$0xff]
    %v114 = vld [vmem:[#allocation6 + $0x38] sm:$0xff]
    %v115 = vld [vmem:[#allocation6 + $0x40] sm:$0xff]
    %v116 = vld [vmem:[#allocation6 + $0x48] sm:$0xff]
    %v117 = vld [vmem:[#allocation6 + $0x50] sm:$0xff]
    %v118 = vld [vmem:[#allocation6 + $0x58] sm:$0xff]
    %v119 = vld [vmem:[#allocation6 + $0x60] sm:$0xff]
    %v120 = vld [vmem:[#allocation6 + $0x68] sm:$0xff]
    %v121 = vld [vmem:[#allocation6 + $0x70] sm:$0xff]
    %v122 = vld [vmem:[#allocation6 + $0x78] sm:$0xff]
    %v123 = vld [vmem:[%s4] sm:$0x1]
    %v125 = vperm.slane %v123, 0
    %127 = vmatpush.msra.mxu0 %v122
    %128 = vmatpush.msra.mxu0 %v121
    %129 = vmatpush.msra.mxu0 %v120
    %130 = vmatpush.msra.mxu0 %v119
    %131 = vmatpush.msra.mxu0 %v118
    %132 = vmatpush.msra.mxu0 %v117
    %133 = vmatpush.msra.mxu0 %v116
    %134 = vmatpush.msra.mxu0 %v115
    %135 = vmatpush.msra.mxu0 %v114
    %136 = vmatpush.msra.mxu0 %v113
    %137 = vmatpush.msra.mxu0 %v112
    %138 = vmatpush.msra.mxu0 %v111
    %139 = vmatpush.msra.mxu0 %v110
    %140 = vmatpush.msra.mxu0 %v109
    %141 = vmatpush.msra.mxu0 %v108
    %142 = vmatpush.msra.mxu0 %v107
    %143 = vmatmul.f32.gmra.mxu0 %v105
    %v144 = vpop.f32.mrf.mxu0
    %v145 = vadd.f32 %v125, %v144
    %146 = vmatmul.f32.gmra.mxu0 %v106
    %v147 = vpop.f32.mrf.mxu0
    %v148 = vadd.f32 %v125, %v147
    %149 = vdwg.mxu0
    %150 = vmax.xlane.f32.xlu0 %v145
    %v151 = vpop.xlane.xlu0 %150
    %152 = vmax.xlane.f32.xlu0 %v148
    %v153 = vpop.xlane.xlu0 %152
    %v154 = vsub.f32 %v145, %v151
    %v155 = vsub.f32 %v148, %v153
    %v156 = vmul.f32 %v154, 1.442695
    %v157 = vpow.pop %v156
    %v158 = vmul.f32 %v155, 1.442695
    %v159 = vpow.pop %v158
    %160 = vadd.xlane.f32.xlu0 %v157
    %v161 = vpop.xlane.xlu0 %160
    %162 = vadd.xlane.f32.xlu0 %v159
    %v163 = vpop.xlane.xlu0 %162
    %v164 = vrcp.pop %v161
    %v165 = vrcp.pop %v163
    %v166 = vmul.f32 %v157, %v164
    %v167 = vmul.f32 %v159, %v165
    %vm168 = vcmask 31744
    %169 = vst.msk [vmem:[%s5] sm:$0xff] %vm168, %v166
    %170 = vst.msk [vmem:[%s5 + $0x8] sm:$0xff] %vm168, %v167
    // Predicated region
    $region34: #{tpu_custom_call.1} parent=1 // pred_check
      _
    $region35: #{tpu_custom_call.1} parent=1 // pred_check_branch
      %172 = sbr.rel (0) target = $region37
    $region36: #{tpu_custom_call.1} parent=1 // pred_region
      _
    $region37: #{tpu_custom_call.1} parent=1 // pred_fallthru
      _
    // Predicated region
    $region38: #{tpu_custom_call.1} parent=1 // pred_check
      _
    $region39: #{tpu_custom_call.1} parent=1 // pred_check_branch
      %174 = sbr.rel (0) target = $region41
    $region40: #{tpu_custom_call.1} parent=1 // pred_region
      _
    $region41: #{tpu_custom_call.1} parent=1 // pred_fallthru
      _
    %175 = vsyncpa [#allocation3], 1
    %176 = vsyncpa [#allocation5], 1

</llo_original>
